<compile_context>
chip_gen: v7x
topology: tpu7x:2x2x1
jax: 0.10.0
libtpu: 0.0.40
codegen_flags: <defaults>
</compile_context>

<pallas_src>
import jax
import jax.numpy as jnp
from jax.experimental import pallas as pl
from jax.experimental.pallas import tpu as pltpu


def _cdiv(a, b):
    return -(-a // b)


def _choose_row_tile(rows, n_batch, cin, cout, in_itemsize, out_itemsize):
    """Rows (of 128 lanes) per spatial tile: ~2 MiB per block, >=8 grid steps."""
    per_row = max(cin * in_itemsize, cout * out_itemsize) * 128
    budget = max(8, (2 * 1024 * 1024) // per_row)
    n_tiles = max(1, _cdiv(rows, budget))
    # Keep enough grid steps for megacore sharding + pipeline overlap (v7x: 2 TCs).
    want = _cdiv(8, max(1, n_batch))
    if n_tiles < want and rows >= 32 * want:
        n_tiles = want
    tr = _cdiv(rows, n_tiles)
    if n_tiles > 1:
        tr = _cdiv(tr, 32) * 32          # keep tiled blocks 32-row aligned
    return tr


def _make_conv1x1_kernel(cin, cout, tr, chunk):
    """out[co, r, :] = b[co] + sum_ci w[co, ci] * x[ci, r, :]  (VPU FMAs)."""

    def kernel(w_ref, b_ref, x_ref, o_ref):
        # w_ref: (cout, cin) f32 SMEM, b_ref: (cout,) f32 SMEM
        # x_ref: (cin, tr, 128) VMEM,  o_ref: (cout, tr, 128) VMEM
        w = [[w_ref[co, ci] for ci in range(cin)] for co in range(cout)]
        b = [b_ref[co] for co in range(cout)]
        for r0 in range(0, tr, chunk):          # static unroll, register-resident chunks
            cur = min(chunk, tr - r0)
            sl = pl.ds(r0, cur)
            accs = [jnp.zeros((cur, 128), jnp.float32) + b[co] for co in range(cout)]
            for ci in range(cin):
                xc = x_ref[ci, sl, :].astype(jnp.float32)
                for co in range(cout):
                    accs[co] = accs[co] + w[co][ci] * xc
            for co in range(cout):
                o_ref[co, sl, :] = accs[co].astype(o_ref.dtype)

    return kernel


def out_conv(x_nchw, weight, bias, *, compute_dtype=None):
    """PyTorch Conv2d(nin, nout, kernel_size=1) forward.

    x: (N, Cin, H, W); weight: (Cout, Cin, 1, 1); bias: (Cout,). Returns NCHW.
    """
    N, Cin, H, W = x_nchw.shape
    Cout = weight.shape[0]
    S = H * W
    out_dtype = x_nchw.dtype
    in_dtype = x_nchw.dtype if compute_dtype is None else jnp.dtype(compute_dtype)

    x = x_nchw.reshape(N, Cin, S)                       # layout-free reshape (NCHW kept)
    if in_dtype != x.dtype:
        x = x.astype(in_dtype)

    in_itemsize = jnp.dtype(in_dtype).itemsize
    out_itemsize = jnp.dtype(out_dtype).itemsize

    rows = _cdiv(S, 128)                                # spatial rows of 128 lanes
    tr = _choose_row_tile(rows, N, Cin, Cout, in_itemsize, out_itemsize)
    n_sp = _cdiv(rows, tr)
    rows_p = n_sp * tr
    Sp = rows_p * 128
    if Sp != S:                                         # only pad spatial, only if needed
        x = jnp.pad(x, ((0, 0), (0, 0), (0, Sp - S)))
    x = x.reshape(N, Cin, rows_p, 128)

    w2d = weight.reshape(Cout, Cin).astype(jnp.float32)  # SMEM scalars
    b1d = bias.astype(jnp.float32)

    chunk = min(32, tr)
    kernel = _make_conv1x1_kernel(Cin, Cout, tr, chunk)

    # Logical (unpadded) cost hint for the XLA scheduler.
    cost = pl.CostEstimate(
        flops=2 * N * S * Cin * Cout,
        transcendentals=0,
        bytes_accessed=(N * S * Cin * in_itemsize
                        + Cout * Cin * 4 + Cout * 4
                        + N * S * Cout * out_itemsize),
    )

    y = pl.pallas_call(
        kernel,
        out_shape=jax.ShapeDtypeStruct((N, Cout, rows_p, 128), out_dtype),
        grid_spec=pltpu.PrefetchScalarGridSpec(
            num_scalar_prefetch=0,
            grid=(N, n_sp),
            in_specs=[
                pl.BlockSpec(memory_space=pltpu.MemorySpace.SMEM),   # weight (Cout, Cin)
                pl.BlockSpec(memory_space=pltpu.MemorySpace.SMEM),   # bias   (Cout,)
                pl.BlockSpec((None, Cin, tr, 128), lambda n, s: (n, 0, s, 0)),
            ],
            out_specs=pl.BlockSpec((None, Cout, tr, 128), lambda n, s: (n, 0, s, 0)),
        ),
        compiler_params=pltpu.CompilerParams(
            dimension_semantics=("parallel", "parallel"),
            vmem_limit_bytes=32 * 1024 * 1024,           # safe on v7x (64 MiB) and v5e/v6e
        ),
        cost_estimate=cost,
    )(w2d, b1d, x)

    y = y.reshape(N, Cout, Sp)
    if Sp != S:
        y = y[:, :, :S]
    return y.reshape(N, Cout, H, W)


if __name__ == "__main__":
    key = jax.random.PRNGKey(0)
    kx, kw, kb = jax.random.split(key, 3)

    nin, nout = 4, 3
    Nb, Hh, Ww = 2, 16, 16

    x = jax.random.normal(kx, (Nb, nin, Hh, Ww), jnp.float32)
    bound = 1.0 / (nin ** 0.5)                           # PyTorch default init range
    weight = jax.random.uniform(kw, (nout, nin, 1, 1), jnp.float32, -bound, bound)
    bias = jax.random.uniform(kb, (nout,), jnp.float32, -bound, bound)

    fwd = jax.jit(out_conv)
    y = fwd(x, weight, bias)
    jax.block_until_ready(y)

    # Pure-JAX reference for the 1x1 conv (PyTorch Conv2d semantics).
    y_ref = (jnp.einsum('nchw,oc->nohw', x, weight.reshape(nout, nin))
             + bias[None, :, None, None])

    assert y.shape == (Nb, nout, Hh, Ww), y.shape
    assert bool(jnp.all(jnp.isfinite(y)))
    assert bool(jnp.allclose(y, y_ref, atol=1e-4, rtol=1e-4)), \
        float(jnp.max(jnp.abs(y - y_ref)))
    print("KERNEL_OK")
</pallas_src>

<mosaic_0001>
module attributes {stable_mosaic.version = 11 : i64} {
  func.func @kernel(%arg0: i32, %arg1: i32, %arg2: memref<3x4xf32, #tpu.memory_space<smem>>, %arg3: memref<3xf32, #tpu.memory_space<smem>>, %arg4: memref<1x4x2x128xf32, #tpu.memory_space<vmem>>, %arg5: memref<1x3x2x128xf32, #tpu.memory_space<vmem>>) attributes {dimension_semantics = [#tpu.dimension_semantics<parallel>, #tpu.dimension_semantics<parallel>], iteration_bounds = array<i64: 2, 1>, scalar_prefetch = 0 : i64, scratch_operands = 0 : i64, tpu.core_type = #tpu.core_type<tc>, window_params = [{transform_indices = @transform_0, window_bounds = array<i64: 3, 4>}, {transform_indices = @transform_1, window_bounds = array<i64: 3>}, {transform_indices = @transform_2, window_bounds = array<i64: 1, 4, 2, 128>}, {transform_indices = @transform_3, window_bounds = array<i64: 1, 3, 2, 128>}]} {
    %c0 = arith.constant 0 : index
    %c0_0 = arith.constant 0 : index
    %0 = memref.load %arg2[%c0, %c0_0] : memref<3x4xf32, #tpu.memory_space<smem>>
    %c0_1 = arith.constant 0 : index
    %c1 = arith.constant 1 : index
    %1 = memref.load %arg2[%c0_1, %c1] : memref<3x4xf32, #tpu.memory_space<smem>>
    %c0_2 = arith.constant 0 : index
    %c2 = arith.constant 2 : index
    %2 = memref.load %arg2[%c0_2, %c2] : memref<3x4xf32, #tpu.memory_space<smem>>
    %c0_3 = arith.constant 0 : index
    %c3 = arith.constant 3 : index
    %3 = memref.load %arg2[%c0_3, %c3] : memref<3x4xf32, #tpu.memory_space<smem>>
    %c1_4 = arith.constant 1 : index
    %c0_5 = arith.constant 0 : index
    %4 = memref.load %arg2[%c1_4, %c0_5] : memref<3x4xf32, #tpu.memory_space<smem>>
    %c1_6 = arith.constant 1 : index
    %c1_7 = arith.constant 1 : index
    %5 = memref.load %arg2[%c1_6, %c1_7] : memref<3x4xf32, #tpu.memory_space<smem>>
    %c1_8 = arith.constant 1 : index
    %c2_9 = arith.constant 2 : index
    %6 = memref.load %arg2[%c1_8, %c2_9] : memref<3x4xf32, #tpu.memory_space<smem>>
    %c1_10 = arith.constant 1 : index
    %c3_11 = arith.constant 3 : index
    %7 = memref.load %arg2[%c1_10, %c3_11] : memref<3x4xf32, #tpu.memory_space<smem>>
    %c2_12 = arith.constant 2 : index
    %c0_13 = arith.constant 0 : index
    %8 = memref.load %arg2[%c2_12, %c0_13] : memref<3x4xf32, #tpu.memory_space<smem>>
    %c2_14 = arith.constant 2 : index
    %c1_15 = arith.constant 1 : index
    %9 = memref.load %arg2[%c2_14, %c1_15] : memref<3x4xf32, #tpu.memory_space<smem>>
    %c2_16 = arith.constant 2 : index
    %c2_17 = arith.constant 2 : index
    %10 = memref.load %arg2[%c2_16, %c2_17] : memref<3x4xf32, #tpu.memory_space<smem>>
    %c2_18 = arith.constant 2 : index
    %c3_19 = arith.constant 3 : index
    %11 = memref.load %arg2[%c2_18, %c3_19] : memref<3x4xf32, #tpu.memory_space<smem>>
    %c0_20 = arith.constant 0 : index
    %12 = memref.load %arg3[%c0_20] : memref<3xf32, #tpu.memory_space<smem>>
    %c1_21 = arith.constant 1 : index
    %13 = memref.load %arg3[%c1_21] : memref<3xf32, #tpu.memory_space<smem>>
    %c2_22 = arith.constant 2 : index
    %14 = memref.load %arg3[%c2_22] : memref<3xf32, #tpu.memory_space<smem>>
    %cst = arith.constant 0.000000e+00 : f32
    %15 = vector.broadcast %cst : f32 to vector<2x128xf32>
    %16 = vector.broadcast %12 : f32 to vector<2x128xf32>
    %17 = arith.addf %15, %16 : vector<2x128xf32>
    %cst_23 = arith.constant 0.000000e+00 : f32
    %18 = vector.broadcast %cst_23 : f32 to vector<2x128xf32>
    %19 = vector.broadcast %13 : f32 to vector<2x128xf32>
    %20 = arith.addf %18, %19 : vector<2x128xf32>
    %cst_24 = arith.constant 0.000000e+00 : f32
    %21 = vector.broadcast %cst_24 : f32 to vector<2x128xf32>
    %22 = vector.broadcast %14 : f32 to vector<2x128xf32>
    %23 = arith.addf %21, %22 : vector<2x128xf32>
    %c0_25 = arith.constant 0 : index
    %c0_26 = arith.constant 0 : index
    %c0_27 = arith.constant 0 : index
    %c0_28 = arith.constant 0 : index
    %24 = vector.load %arg4[%c0_25, %c0_26, %c0_27, %c0_28] : memref<1x4x2x128xf32, #tpu.memory_space<vmem>>, vector<1x1x2x128xf32>
    %25 = vector.shape_cast %24 : vector<1x1x2x128xf32> to vector<2x128xf32>
    %26 = vector.broadcast %0 : f32 to vector<2x128xf32>
    %27 = arith.mulf %26, %25 : vector<2x128xf32>
    %28 = arith.addf %17, %27 : vector<2x128xf32>
    %29 = vector.broadcast %4 : f32 to vector<2x128xf32>
    %30 = arith.mulf %29, %25 : vector<2x128xf32>
    %31 = arith.addf %20, %30 : vector<2x128xf32>
    %32 = vector.broadcast %8 : f32 to vector<2x128xf32>
    %33 = arith.mulf %32, %25 : vector<2x128xf32>
    %34 = arith.addf %23, %33 : vector<2x128xf32>
    %c0_29 = arith.constant 0 : index
    %c1_30 = arith.constant 1 : index
    %c0_31 = arith.constant 0 : index
    %c0_32 = arith.constant 0 : index
    %35 = vector.load %arg4[%c0_29, %c1_30, %c0_31, %c0_32] : memref<1x4x2x128xf32, #tpu.memory_space<vmem>>, vector<1x1x2x128xf32>
    %36 = vector.shape_cast %35 : vector<1x1x2x128xf32> to vector<2x128xf32>
    %37 = vector.broadcast %1 : f32 to vector<2x128xf32>
    %38 = arith.mulf %37, %36 : vector<2x128xf32>
    %39 = arith.addf %28, %38 : vector<2x128xf32>
    %40 = vector.broadcast %5 : f32 to vector<2x128xf32>
    %41 = arith.mulf %40, %36 : vector<2x128xf32>
    %42 = arith.addf %31, %41 : vector<2x128xf32>
    %43 = vector.broadcast %9 : f32 to vector<2x128xf32>
    %44 = arith.mulf %43, %36 : vector<2x128xf32>
    %45 = arith.addf %34, %44 : vector<2x128xf32>
    %c0_33 = arith.constant 0 : index
    %c2_34 = arith.constant 2 : index
    %c0_35 = arith.constant 0 : index
    %c0_36 = arith.constant 0 : index
    %46 = vector.load %arg4[%c0_33, %c2_34, %c0_35, %c0_36] : memref<1x4x2x128xf32, #tpu.memory_space<vmem>>, vector<1x1x2x128xf32>
    %47 = vector.shape_cast %46 : vector<1x1x2x128xf32> to vector<2x128xf32>
    %48 = vector.broadcast %2 : f32 to vector<2x128xf32>
    %49 = arith.mulf %48, %47 : vector<2x128xf32>
    %50 = arith.addf %39, %49 : vector<2x128xf32>
    %51 = vector.broadcast %6 : f32 to vector<2x128xf32>
    %52 = arith.mulf %51, %47 : vector<2x128xf32>
    %53 = arith.addf %42, %52 : vector<2x128xf32>
    %54 = vector.broadcast %10 : f32 to vector<2x128xf32>
    %55 = arith.mulf %54, %47 : vector<2x128xf32>
    %56 = arith.addf %45, %55 : vector<2x128xf32>
    %c0_37 = arith.constant 0 : index
    %c3_38 = arith.constant 3 : index
    %c0_39 = arith.constant 0 : index
    %c0_40 = arith.constant 0 : index
    %57 = vector.load %arg4[%c0_37, %c3_38, %c0_39, %c0_40] : memref<1x4x2x128xf32, #tpu.memory_space<vmem>>, vector<1x1x2x128xf32>
    %58 = vector.shape_cast %57 : vector<1x1x2x128xf32> to vector<2x128xf32>
    %59 = vector.broadcast %3 : f32 to vector<2x128xf32>
    %60 = arith.mulf %59, %58 : vector<2x128xf32>
    %61 = arith.addf %50, %60 : vector<2x128xf32>
    %62 = vector.broadcast %7 : f32 to vector<2x128xf32>
    %63 = arith.mulf %62, %58 : vector<2x128xf32>
    %64 = arith.addf %53, %63 : vector<2x128xf32>
    %65 = vector.broadcast %11 : f32 to vector<2x128xf32>
    %66 = arith.mulf %65, %58 : vector<2x128xf32>
    %67 = arith.addf %56, %66 : vector<2x128xf32>
    %c0_41 = arith.constant 0 : index
    %c0_42 = arith.constant 0 : index
    %c0_43 = arith.constant 0 : index
    %c0_44 = arith.constant 0 : index
    %68 = vector.load %arg5[%c0_41, %c0_42, %c0_43, %c0_44] : memref<1x3x2x128xf32, #tpu.memory_space<vmem>>, vector<1x1x2x128xf32>
    %69 = vector.shape_cast %68 : vector<1x1x2x128xf32> to vector<2x128xf32>
    %70 = vector.shape_cast %61 : vector<2x128xf32> to vector<1x1x2x128xf32>
    tpu.vector_store %arg5[%c0_41, %c0_42, %c0_43, %c0_44], %70 {strides = array<i32>} : memref<1x3x2x128xf32, #tpu.memory_space<vmem>>, vector<1x1x2x128xf32>,
    %c0_45 = arith.constant 0 : index
    %c1_46 = arith.constant 1 : index
    %c0_47 = arith.constant 0 : index
    %c0_48 = arith.constant 0 : index
    %71 = vector.load %arg5[%c0_45, %c1_46, %c0_47, %c0_48] : memref<1x3x2x128xf32, #tpu.memory_space<vmem>>, vector<1x1x2x128xf32>
    %72 = vector.shape_cast %71 : vector<1x1x2x128xf32> to vector<2x128xf32>
    %73 = vector.shape_cast %64 : vector<2x128xf32> to vector<1x1x2x128xf32>
    tpu.vector_store %arg5[%c0_45, %c1_46, %c0_47, %c0_48], %73 {strides = array<i32>} : memref<1x3x2x128xf32, #tpu.memory_space<vmem>>, vector<1x1x2x128xf32>,
    %c0_49 = arith.constant 0 : index
    %c2_50 = arith.constant 2 : index
    %c0_51 = arith.constant 0 : index
    %c0_52 = arith.constant 0 : index
    %74 = vector.load %arg5[%c0_49, %c2_50, %c0_51, %c0_52] : memref<1x3x2x128xf32, #tpu.memory_space<vmem>>, vector<1x1x2x128xf32>
    %75 = vector.shape_cast %74 : vector<1x1x2x128xf32> to vector<2x128xf32>
    %76 = vector.shape_cast %67 : vector<2x128xf32> to vector<1x1x2x128xf32>
    tpu.vector_store %arg5[%c0_49, %c2_50, %c0_51, %c0_52], %76 {strides = array<i32>} : memref<1x3x2x128xf32, #tpu.memory_space<vmem>>, vector<1x1x2x128xf32>,
    return
  }
  func.func @transform_0(%arg0: i32, %arg1: i32) -> (i32, i32) {
    %c0_i32 = arith.constant 0 : i32
    %c0_i32_0 = arith.constant 0 : i32
    %c0_i32_1 = arith.constant 0 : i32
    return %c0_i32, %c0_i32_0 : i32, i32
  }
  func.func @transform_1(%arg0: i32, %arg1: i32) -> i32 {
    %c0_i32 = arith.constant 0 : i32
    %c0_i32_0 = arith.constant 0 : i32
    return %c0_i32 : i32
  }
  func.func @transform_2(%arg0: i32, %arg1: i32) -> (i32, i32, i32, i32) {
    %c0_i32 = arith.constant 0 : i32
    %c0_i32_0 = arith.constant 0 : i32
    %c0_i32_1 = arith.constant 0 : i32
    return %arg0, %c0_i32, %arg1, %c0_i32_0 : i32, i32, i32, i32
  }
  func.func @transform_3(%arg0: i32, %arg1: i32) -> (i32, i32, i32, i32) {
    %c0_i32 = arith.constant 0 : i32
    %c0_i32_0 = arith.constant 0 : i32
    %c0_i32_1 = arith.constant 0 : i32
    return %arg0, %c0_i32, %arg1, %c0_i32_0 : i32, i32, i32, i32
  }
}

</mosaic_0001>

<llo_original>
// kernel: out_conv.1
$region0: #{out_conv.1}
  #allocation0 [shape = 'u32[]', space=smem, size = 0x4, offset = 0x4, fixed_abs, tag = 'smem constant byte address 0x4 - core index']
  #allocation1 [shape = 'u32[144,128]{1,0:T(1,128)}', space=vmem, size = 0x12000, scoped, tag = 'internal scratch']
  %s0 = inlined_call_operand.vmem [shape: f32[3,4], index: 0, kind: input, shape index: {}]
  %s1 = inlined_call_operand.vmem [shape: f32[3], index: 1, kind: input, shape index: {}]
  %s2 = inlined_call_operand.vmem [shape: f32[2,4,2,128], index: 2, kind: input, shape index: {}]
  %s3 = inlined_call_operand.vmem [shape: f32[2,3,2,128], index: 3, kind: output, shape index: {}]
  %s4 = sld [smem:[#allocation0]]
  $region53: #{out_conv.1} parent=0
    _
  %s6 = ssub.s32 1, %s4
  %s7 = scalar_select 0, %s6, %s4
  $region1: #{out_conv.1} parent=0
    #allocation2 [shape = 'u8[2048]{0}', space=smem, size = 0x800, scoped, tag = 'input window, operand 0, single buffered']
    #allocation3 [shape = 's32[2]{0}', space=sflag, size = 0x8, scoped, tag = 'scoped memory for out_conv.1']
    #allocation4 [shape = 'u8[512]{0}', space=smem, size = 0x200, scoped, tag = 'input window, operand 1, single buffered']
    #allocation5 [shape = 's32[1]{0}', space=sflag, size = 0x4, scoped, tag = 'scoped memory for out_conv.1']
    %8 = vsyncpa [#allocation3], 0
    %9 = vsyncpa [#allocation5], 0
    loop: start=0, step=1, limit=4
    $region2: #{out_conv.1} parent=1 // loop_pre_header
      _
    $region3: #{out_conv.1} parent=1 // loop_header
      %s11 = sphi 0, %s15
      %p12 = scmp.ge.s32.totalorder %s11, 4
      %s18 = sphi 0, %s30
      %s19 = sphi 0, %s26
      %s20 = sphi 0, %s18
      %s21 = sphi 0, %s19
      %s22 = sphi 0, %s20
      %s23 = sphi 0, %s21
      %s31 = sphi 0, %s31
      %s33 = sphi 0, %s31
      %s34 = sphi 0, %s33
      %s48 = sphi 0, %s34
      %s52 = sphi 0, %s52
      %s54 = sphi 0, %s52
      %s55 = sphi 0, %s54
      %s69 = sphi 0, %s55
      %s77 = sphi 0, %s79
      %s80 = sphi 0, %s77
      %s81 = sphi 0, %s80
      %s97 = sphi 0, %s81
      %s105 = sphi 0, %s107
      %s108 = sphi 0, %s105
      %s109 = sphi 0, %s108
      %s125 = sphi 0, %s109
    $region4: #{out_conv.1} parent=1 // loop_header_branch
      %14 = sbr.rel (%p12) target = $region8
    $region5: #{out_conv.1} parent=1 // loop_body
      %s16 = ssub.s32 %s11, 1
      %s17 = ssub.s32 %s11, 2
      %s24 = sadd.s32 1, %s19
      %p25 = scmp.ge.s32.totalorder %s24, 1
      %s26 = scalar_select %p25, 0, %s24
      %s27 = sadd.s32 1, %s18
      %s28 = scalar_select %p25, %s27, %s18
      %p29 = scmp.ge.s32.totalorder %s28, 2
      %s30 = scalar_select %p29, 0, %s28
      %s32 = sadd.s32 %s31, 1
      %p35 = scmp.eq.s32.totalorder %s11, 1
      %p36 = scmp.ne.s32.totalorder %s31, %s33
      %p37 = scmp.eq.s32.totalorder %s11, 0
      %p38 = por %p36, %p37
      %p39 = scmp.ne.s32.totalorder %s31, %s33
      %p40 = scmp.eq.s32.totalorder %s16, 1
      %p41 = por %p39, %p40
      %p42 = scmp.ne.s32.totalorder %s33, %s34
      %p43 = scmp.eq.s32.totalorder %s16, 0
      %p44 = por %p42, %p43
      %p45 = scmp.ne.s32.totalorder %s33, %s34
      %p46 = scmp.eq.s32.totalorder %s17, 1
      %p47 = por %p45, %p46
      %p49 = scmp.ne.s32.totalorder %s34, %s48
      %p50 = scmp.eq.s32.totalorder %s17, 0
      %p51 = por %p49, %p50
      %s53 = sadd.s32 %s52, 1
      %p56 = scmp.eq.s32.totalorder %s11, 1
      %p57 = scmp.ne.s32.totalorder %s52, %s54
      %p58 = scmp.eq.s32.totalorder %s11, 0
      %p59 = por %p57, %p58
      %p60 = scmp.ne.s32.totalorder %s52, %s54
      %p61 = scmp.eq.s32.totalorder %s16, 1
      %p62 = por %p60, %p61
      %p63 = scmp.ne.s32.totalorder %s54, %s55
      %p64 = scmp.eq.s32.totalorder %s16, 0
      %p65 = por %p63, %p64
      %p66 = scmp.ne.s32.totalorder %s54, %s55
      %p67 = scmp.eq.s32.totalorder %s17, 1
      %p68 = por %p66, %p67
      %p70 = scmp.ne.s32.totalorder %s55, %s69
      %p71 = scmp.eq.s32.totalorder %s17, 0
      %p72 = por %p70, %p71
      %s73 = ssub.s32 %s18, %s30
      %s74 = ssub.s32 %s19, %s26
      %s75 = sor.u32 %s73, %s74
      %p76 = scmp.eq.s32.totalorder %s75, 0
      %s78 = sadd.s32 %s77, 1
      %s79 = scalar_select %p76, %s77, %s78
      %p82 = pneg %p76
      %p83 = scmp.eq.s32.totalorder %s11, 1
      %p84 = por %p82, %p83
      %p85 = scmp.ne.s32.totalorder %s77, %s80
      %p86 = scmp.eq.s32.totalorder %s11, 0
      %p87 = por %p85, %p86
      %p88 = scmp.ne.s32.totalorder %s77, %s80
      %p89 = scmp.eq.s32.totalorder %s16, 1
      %p90 = por %p88, %p89
      %p91 = scmp.ne.s32.totalorder %s80, %s81
      %p92 = scmp.eq.s32.totalorder %s16, 0
      %p93 = por %p91, %p92
      %p94 = scmp.ne.s32.totalorder %s80, %s81
      %p95 = scmp.eq.s32.totalorder %s17, 1
      %p96 = por %p94, %p95
      %p98 = scmp.ne.s32.totalorder %s81, %s97
      %p99 = scmp.eq.s32.totalorder %s17, 0
      %p100 = por %p98, %p99
      %s101 = ssub.s32 %s18, %s30
      %s102 = ssub.s32 %s19, %s26
      %s103 = sor.u32 %s101, %s102
      %p104 = scmp.eq.s32.totalorder %s103, 0
      %s106 = sadd.s32 %s105, 1
      %s107 = scalar_select %p104, %s105, %s106
      %p110 = pneg %p104
      %p111 = scmp.eq.s32.totalorder %s11, 1
      %p112 = por %p110, %p111
      %p113 = scmp.ne.s32.totalorder %s105, %s108
      %p114 = scmp.eq.s32.totalorder %s11, 0
      %p115 = por %p113, %p114
      %p116 = scmp.ne.s32.totalorder %s105, %s108
      %p117 = scmp.eq.s32.totalorder %s16, 1
      %p118 = por %p116, %p117
      %p119 = scmp.ne.s32.totalorder %s108, %s109
      %p120 = scmp.eq.s32.totalorder %s16, 0
      %p121 = por %p119, %p120
      %p122 = scmp.ne.s32.totalorder %s108, %s109
      %p123 = scmp.eq.s32.totalorder %s17, 1
      %p124 = por %p122, %p123
      %p126 = scmp.ne.s32.totalorder %s109, %s125
      %p127 = scmp.eq.s32.totalorder %s17, 0
      %p128 = por %p126, %p127
      %p129 = scmp.le.s32.totalorder 1, %s11
      %p130 = scmp.lt.s32.totalorder %s11, 3
      %p131 = pnand %p129, %p130
      %p132 = pneg %p131
      // Predicated region
      $region9: #{out_conv.1} parent=5 // pred_check
        _
      $region10: #{out_conv.1} parent=5 // pred_check_branch
        %134 = sbr.rel (%p131) target = $region12
      $region11: #{out_conv.1} parent=5 // pred_region
        %s135 = ssub.s32 %s11, 1
        // Predicated region
        $region13: #{out_conv.1} parent=11 // pred_check
          %p136 = pneg %p44
        $region14: #{out_conv.1} parent=11 // pred_check_branch
          %138 = sbr.rel (%p136) target = $region16
        $region15: #{out_conv.1} parent=11 // pred_region
          %s140 = ssub.s32 64, 64
          %141 = vsyncadd [#allocation3], %s140
          %s143 = sshll.u32 %s0, 4
          %s144 = int_to_ptr.vmem [resolvable:$true] %s143
          %146 = dma.vmem_to_smem %s144, 64, [#allocation2], [#allocation3]
        $region16: #{out_conv.1} parent=11 // pred_fallthru
          _
        // Predicated region
        $region17: #{out_conv.1} parent=11 // pred_check
          %p147 = pneg %p65
        $region18: #{out_conv.1} parent=11 // pred_check_branch
          %149 = sbr.rel (%p147) target = $region20
        $region19: #{out_conv.1} parent=11 // pred_region
          %s151 = ssub.s32 16, 16
          %152 = vsyncadd [#allocation5], %s151
          %s154 = sshll.u32 %s1, 4
          %s155 = int_to_ptr.vmem [resolvable:$true] %s154
          %157 = dma.vmem_to_smem %s155, 16, [#allocation4], [#allocation5]
        $region20: #{out_conv.1} parent=11 // pred_fallthru
          _
      $region12: #{out_conv.1} parent=5 // pred_fallthru
        _
      %p158 = scmp.lt.s32.totalorder %s11, 2
      // Predicated region
      $region21: #{out_conv.1} parent=5 // pred_check
        %p159 = pneg %p158
      $region22: #{out_conv.1} parent=5 // pred_check_branch
        %161 = sbr.rel (%p159) target = $region24
      $region23: #{out_conv.1} parent=5 // pred_region
        // Predicated region
        $region25: #{out_conv.1} parent=23 // pred_check
          %p162 = pneg %p87
        $region26: #{out_conv.1} parent=23 // pred_check_branch
          %164 = sbr.rel (%p162) target = $region28
        $region27: #{out_conv.1} parent=23 // pred_region
          %p165 = scmp.lt.s32.totalorder %s18, 1
          %s166 = scalar_select %p165, %s18, 1
          %p167 = scmp.lt.s32.totalorder %s19, 0
          %s168 = scalar_select %p167, %s19, 0
          %s169 = smul.addr %s166, 4
          %s170 = sadd.s32 %s168, %s169
          %s171 = smul.addr %s170, 2
          %s172 = scalar_lea.vmem %s2, %s171
        $region28: #{out_conv.1} parent=23 // pred_fallthru
          _
      $region24: #{out_conv.1} parent=5 // pred_fallthru
        _
      %p173 = scmp.le.s32.totalorder 1, %s11
      %p174 = scmp.lt.s32.totalorder %s11, 3
      %p175 = pnand %p173, %p174
      %p176 = pneg %p175
      // Predicated region
      $region29: #{out_conv.1} parent=5 // pred_check
        _
      $region30: #{out_conv.1} parent=5 // pred_check_branch
        %178 = sbr.rel (%p175) target = $region32
      $region31: #{out_conv.1} parent=5 // pred_region
        %s179 = ssub.s32 %s11, 1
        // Predicated region
        $region33: #{out_conv.1} parent=31 // pred_check
          %p180 = pneg %p44
        $region34: #{out_conv.1} parent=31 // pred_check_branch
          %182 = sbr.rel (%p180) target = $region36
        $region35: #{out_conv.1} parent=31 // pred_region
          %183 = dma.done [#allocation3], 64
        $region36: #{out_conv.1} parent=31 // pred_fallthru
          _
        // Predicated region
        $region37: #{out_conv.1} parent=31 // pred_check
          %p184 = pneg %p65
        $region38: #{out_conv.1} parent=31 // pred_check_branch
          %186 = sbr.rel (%p184) target = $region40
        $region39: #{out_conv.1} parent=31 // pred_region
          %187 = dma.done [#allocation5], 16
        $region40: #{out_conv.1} parent=31 // pred_fallthru
          _
        %188 = sfence
        %p189 = pneg %p44
        %p190 = pneg %p41
        %p191 = pneg %p65
        %p192 = pneg %p62
        %p193 = scmp.lt.s32.totalorder %s20, 1
        %s194 = scalar_select %p193, %s20, 1
        %p195 = scmp.lt.s32.totalorder %s21, 0
        %s196 = scalar_select %p195, %s21, 0
        %s197 = smul.addr %s194, 4
        %s198 = sadd.s32 %s196, %s197
        %s199 = smul.addr %s198, 2
        %s200 = scalar_lea.vmem %s2, %s199
        %p201 = pneg %p93
        %p202 = pneg %p90
        %p203 = pneg %p121
        %p204 = pneg %p118
        %p205 = scmp.lt.s32.totalorder %s20, 1
        %s206 = scalar_select %p205, %s20, 1
        %p207 = scmp.lt.s32.totalorder %s21, 0
        %s208 = scalar_select %p207, %s21, 0
        %s209 = smul.addr %s206, 3
        %s210 = sadd.s32 %s208, %s209
        %s211 = smul.addr %s210, 2
        %s212 = scalar_lea.vmem %s3, %s211
        %p213 = scmp.lt.s32.totalorder %s20, 1
        %s214 = scalar_select %p213, %s20, 1
        %p215 = scmp.lt.s32.totalorder %s21, 0
        %s216 = scalar_select %p215, %s21, 0
        %s217 = smul.addr %s214, 4
        %s218 = sadd.s32 %s216, %s217
        %s219 = smul.addr %s218, 2
        %s220 = scalar_lea.vmem %s2, %s219
        %p221 = scmp.lt.s32.totalorder %s20, 1
        %s222 = scalar_select %p221, %s20, 1
        %p223 = scmp.lt.s32.totalorder %s21, 0
        %s224 = scalar_select %p223, %s21, 0
        %s225 = smul.addr %s222, 3
        %s226 = sadd.s32 %s224, %s225
        %s227 = smul.addr %s226, 2
        %s228 = scalar_lea.vmem %s3, %s227
        %s229 = sld [smem:[#allocation2]]
        %s230 = sld [smem:[#allocation2 + $0x1]]
        %s231 = sld [smem:[#allocation2 + $0x2]]
        %s232 = sld [smem:[#allocation2 + $0x3]]
        %s233 = sld [smem:[#allocation2 + $0x80]]
        %s234 = sld [smem:[#allocation2 + $0x81]]
        %s235 = sld [smem:[#allocation2 + $0x82]]
        %s236 = sld [smem:[#allocation2 + $0x83]]
        %s237 = sld [smem:[#allocation2 + $0x100]]
        %s238 = sld [smem:[#allocation2 + $0x101]]
        %s239 = sld [smem:[#allocation2 + $0x102]]
        %s240 = sld [smem:[#allocation2 + $0x103]]
        %s241 = sld [smem:[#allocation4]]
        %s242 = sld [smem:[#allocation4 + $0x1]]
        %s243 = sld [smem:[#allocation4 + $0x2]]
        %v244 = vstv %s241
        %v245 = vadd.f32 %v244, 0.0
        %v246 = vstv %s242
        %v247 = vadd.f32 %v246, 0.0
        %v248 = vstv %s243
        %v249 = vadd.f32 %v248, 0.0
        %v250 = vld [vmem:[%s220] sm:$0x3]
        %v251 = vstv %s229
        %v252 = vmul.f32 %v251, %v250
        %v253 = vadd.f32 %v245, %v252
        %v254 = vstv %s233
        %v255 = vmul.f32 %v254, %v250
        %v256 = vadd.f32 %v247, %v255
        %v257 = vstv %s237
        %v258 = vmul.f32 %v257, %v250
        %v259 = vadd.f32 %v249, %v258
        %s260 = scalar_lea.vmem %s220, 2
        %v261 = vld [vmem:[%s260] sm:$0x3]
        %v262 = vstv %s230
        %v263 = vmul.f32 %v262, %v261
        %v264 = vadd.f32 %v253, %v263
        %v265 = vstv %s234
        %v266 = vmul.f32 %v265, %v261
        %v267 = vadd.f32 %v256, %v266
        %v268 = vstv %s238
        %v269 = vmul.f32 %v268, %v261
        %v270 = vadd.f32 %v259, %v269
        %s271 = scalar_lea.vmem %s220, 4
        %v272 = vld [vmem:[%s271] sm:$0x3]
        %v273 = vstv %s231
        %v274 = vmul.f32 %v273, %v272
        %v275 = vadd.f32 %v264, %v274
        %v276 = vstv %s235
        %v277 = vmul.f32 %v276, %v272
        %v278 = vadd.f32 %v267, %v277
        %v279 = vstv %s239
        %v280 = vmul.f32 %v279, %v272
        %v281 = vadd.f32 %v270, %v280
        %s282 = scalar_lea.vmem %s220, 6
        %v283 = vld [vmem:[%s282] sm:$0x3]
        %v284 = vstv %s232
        %v285 = vmul.f32 %v284, %v283
        %v286 = vadd.f32 %v275, %v285
        %v287 = vstv %s236
        %v288 = vmul.f32 %v287, %v283
        %v289 = vadd.f32 %v278, %v288
        %v290 = vstv %s240
        %v291 = vmul.f32 %v290, %v283
        %v292 = vadd.f32 %v281, %v291
        %293 = vst [vmem:[%s228] sm:$0x3] %v286
        %s294 = scalar_lea.vmem %s228, 2
        %295 = vst [vmem:[%s294] sm:$0x3] %v289
        %s296 = scalar_lea.vmem %s228, 4
        %297 = vst [vmem:[%s296] sm:$0x3] %v292
        %p298 = scmp.lt.s32.totalorder %s20, 1
        %s299 = scalar_select %p298, %s20, 1
        %p300 = scmp.lt.s32.totalorder %s21, 0
        %s301 = scalar_select %p300, %s21, 0
        %s302 = smul.addr %s299, 3
        %s303 = sadd.s32 %s301, %s302
        %s304 = smul.addr %s303, 2
        %s305 = scalar_lea.vmem %s3, %s304
        // Predicated region
        $region41: #{out_conv.1} parent=31 // pred_check
          %p306 = pneg %p118
        $region42: #{out_conv.1} parent=31 // pred_check_branch
          %308 = sbr.rel (%p306) target = $region44
        $region43: #{out_conv.1} parent=31 // pred_region
          _
        $region44: #{out_conv.1} parent=31 // pred_fallthru
          _
      $region32: #{out_conv.1} parent=5 // pred_fallthru
        _
      %p309 = scmp.le.s32.totalorder 2, %s11
      // Predicated region
      $region45: #{out_conv.1} parent=5 // pred_check
        %p310 = pneg %p309
      $region46: #{out_conv.1} parent=5 // pred_check_branch
        %312 = sbr.rel (%p310) target = $region48
      $region47: #{out_conv.1} parent=5 // pred_region
        %s313 = ssub.s32 %s11, 2
        // Predicated region
        $region49: #{out_conv.1} parent=47 // pred_check
          %p314 = pneg %p124
        $region50: #{out_conv.1} parent=47 // pred_check_branch
          %316 = sbr.rel (%p314) target = $region52
        $region51: #{out_conv.1} parent=47 // pred_region
          %p317 = scmp.lt.s32.totalorder %s22, 1
          %s318 = scalar_select %p317, %s22, 1
          %p319 = scmp.lt.s32.totalorder %s23, 0
          %s320 = scalar_select %p319, %s23, 0
          %s321 = smul.addr %s318, 3
          %s322 = sadd.s32 %s320, %s321
          %s323 = smul.addr %s322, 2
          %s324 = scalar_lea.vmem %s3, %s323
        $region52: #{out_conv.1} parent=47 // pred_fallthru
          _
      $region48: #{out_conv.1} parent=5 // pred_fallthru
        _
    $region6: #{out_conv.1} parent=1 // loop_footer
      %s15 = sadd.s32 1, %s11
    $region7: #{out_conv.1} parent=1 // loop_footer_branch
      %10 = sbr.rel target = $region3
    $region8: #{out_conv.1} parent=1 // loop_exit
      _
    %325 = vsyncpa [#allocation3], 1
    %s326 = scalar_lea.sflag [#allocation3], 1
    %327 = vsyncpa %s326, 1
    %328 = vsyncpa [#allocation5], 1

</llo_original>
